<compile_context>
chip_gen: v5e
topology: v5e:2x2
jax: 0.10.0
libtpu: 0.0.40
codegen_flags: <defaults>
</compile_context>

<pallas_src>
import jax
import jax.numpy as jnp
from jax.experimental import pallas as pl
from jax.experimental.pallas import tpu as pltpu


def _residual_linear_kernel_f32(x_ref, w_ref, b_ref, o_ref):
    # f32 output: accumulate directly into the K-resident output tile
    # (output index map ignores k), no scratch, no finalize copy.
    j = pl.program_id(1)
    k = pl.program_id(2)

    @pl.when(k == 0)
    def _init():
        # Fold bias into the accumulator init (saves a full VPU pass).
        o_ref[...] = jnp.broadcast_to(b_ref[...].astype(o_ref.dtype),
                                      o_ref.shape)

    @pl.when(k == j)
    def _residual():
        # TK == TN, so the x matmul tile at k == j is exactly the residual tile.
        o_ref[...] += x_ref[...].astype(o_ref.dtype)

    o_ref[...] += jnp.dot(x_ref[...], w_ref[...],
                          preferred_element_type=jnp.float32)


def _residual_linear_kernel_acc(x_ref, w_ref, b_ref, o_ref, acc_ref):
    # Narrow output dtype: f32 VMEM accumulator, cast once on the last K step.
    j = pl.program_id(1)
    k = pl.program_id(2)

    @pl.when(k == 0)
    def _init():
        acc_ref[...] = jnp.broadcast_to(b_ref[...].astype(jnp.float32),
                                        acc_ref.shape)

    @pl.when(k == j)
    def _residual():
        acc_ref[...] += x_ref[...].astype(jnp.float32)

    acc_ref[...] += jnp.dot(x_ref[...], w_ref[...],
                            preferred_element_type=jnp.float32)

    @pl.when(k == pl.num_programs(2) - 1)
    def _finalize():
        o_ref[...] = acc_ref[...].astype(o_ref.dtype)


def _round_up(x, m):
    return (x + m - 1) // m * m


@jax.jit
def residual_linear(x, w, b):
    """Computes Linear(x) + x where Linear uses weight w (D_in == D_out) and bias b.

    x: [B, S, D]
    w: [D, D]   stored as W^T relative to PyTorch, i.e. y = x @ w + b
    b: [D]
    """
    B, S, D = x.shape
    R = B * S
    out_dtype = x.dtype
    in_itemsize = jnp.dtype(x.dtype).itemsize
    w_itemsize = jnp.dtype(w.dtype).itemsize
    out_itemsize = jnp.dtype(out_dtype).itemsize

    # dtype-aware sublane granule (f32: 8, bf16: 16, int8/fp8: 32)
    sub = {4: 8, 2: 16, 1: 32}.get(in_itemsize, 8)

    # ---- tile selection ------------------------------------------------
    D_pad = _round_up(D, 128)
    # TK == TN so the residual fold (pl.when(k == j)) is exact.
    TN = next(t for t in (512, 256, 128) if D_pad % t == 0)
    TK = TN

    if R >= 1024:
        TM = 512
        R_pad = _round_up(R, TM)
    elif R >= 512:
        TM = 256
        R_pad = _round_up(R, TM)
    elif R >= 2 * sub:
        # keep >= 2 blocks along the parallel M axis so both v7x cores get work
        TM = _round_up(-(-R // 2), sub)
        R_pad = 2 * TM
    else:
        TM = _round_up(R, sub)
        R_pad = TM

    use_acc = jnp.dtype(out_dtype) != jnp.dtype(jnp.float32)

    # VMEM budget: double-buffered x/w/bias tiles + double-buffered output tile
    # (+ f32 accumulator when the output dtype is narrower than f32).
    vmem_need = (2 * (TM * TK + TK * TN + TN) * in_itemsize
                 + 2 * TM * TN * out_itemsize)
    if use_acc:
        vmem_need += TM * TN * 4
    vmem_limit = int(min(32 * 1024 * 1024,
                         max(2 * vmem_need + (1 << 20), 16 * 1024 * 1024)))

    # ---- pad only the axes that need it (skip entirely when aligned) ----
    x2 = x.reshape(R, D)
    if R_pad != R or D_pad != D:
        x2p = jnp.pad(x2, ((0, R_pad - R), (0, D_pad - D)))
    else:
        x2p = x2
    wp = w if D_pad == D else jnp.pad(w, ((0, D_pad - D), (0, D_pad - D)))
    bp = (b if D_pad == D else jnp.pad(b, (0, D_pad - D))).reshape(1, D_pad)

    grid = (R_pad // TM, D_pad // TN, D_pad // TK)

    cost = pl.CostEstimate(
        flops=int(2 * R_pad * D_pad * D_pad),
        transcendentals=0,
        bytes_accessed=int(
            R_pad * D_pad * in_itemsize * (D_pad // TN)       # x re-read per N block
            + D_pad * D_pad * w_itemsize * (R_pad // TM)      # w re-read per M block
            + D_pad * jnp.dtype(b.dtype).itemsize * (R_pad // TM)
            + R_pad * D_pad * out_itemsize),                  # output written once
    )

    in_specs = [
        pl.BlockSpec((TM, TK), lambda i, j, k: (i, k)),   # x (matmul + residual)
        pl.BlockSpec((TK, TN), lambda i, j, k: (k, j)),   # w
        pl.BlockSpec((1, TN), lambda i, j, k: (0, j)),    # bias
    ]
    out_spec = pl.BlockSpec((TM, TN), lambda i, j, k: (i, j))

    if use_acc:
        kernel = _residual_linear_kernel_acc
        scratch = [pltpu.VMEM((TM, TN), jnp.float32)]
    else:
        kernel = _residual_linear_kernel_f32
        scratch = []

    out2 = pl.pallas_call(
        kernel,
        out_shape=jax.ShapeDtypeStruct((R_pad, D_pad), out_dtype),
        grid_spec=pltpu.PrefetchScalarGridSpec(
            num_scalar_prefetch=0,
            grid=grid,
            in_specs=in_specs,
            out_specs=out_spec,
            scratch_shapes=scratch,
        ),
        compiler_params=pltpu.CompilerParams(
            dimension_semantics=("parallel", "parallel", "arbitrary"),
            vmem_limit_bytes=vmem_limit),
        cost_estimate=cost,
    )(x2p, wp, bp)

    if R_pad != R or D_pad != D:
        out2 = out2[:R, :D]
    return out2.reshape(B, S, D)


def reference(x, w, b):
    return jnp.einsum("bsd,de->bse", x, w) + b + x


if __name__ == "__main__":
    key = jax.random.PRNGKey(0)
    kx, kw, kb = jax.random.split(key, 3)

    batch, seq, hidden = 2, 8, 32
    x = jax.random.normal(kx, (batch, seq, hidden), dtype=jnp.float32)
    # deterministic parameter init (synthetic; not loaded from a checkpoint)
    w = jax.random.normal(kw, (hidden, hidden), dtype=jnp.float32) * 0.02
    b = jax.random.normal(kb, (hidden,), dtype=jnp.float32) * 0.02

    # f32 path (no scratch accumulator)
    out = residual_linear(x, w, b)
    out = jax.block_until_ready(out)
    ref = reference(x, w, b)
    assert out.shape == ref.shape
    assert jnp.allclose(out, ref, atol=1e-5, rtol=1e-5), "f32 mismatch vs reference"

    # bf16 path (f32 VMEM accumulator, dtype-aware sublane tiling)
    xb = x.astype(jnp.bfloat16)
    wb = w.astype(jnp.bfloat16)
    bb = b.astype(jnp.bfloat16)
    out_bf = residual_linear(xb, wb, bb)
    out_bf = jax.block_until_ready(out_bf)
    ref_bf = reference(xb.astype(jnp.float32), wb.astype(jnp.float32),
                       bb.astype(jnp.float32))
    assert out_bf.shape == ref_bf.shape
    assert jnp.allclose(out_bf.astype(jnp.float32), ref_bf,
                        atol=1e-1, rtol=1e-1), "bf16 mismatch vs reference"

    print("KERNEL_OK")
</pallas_src>

<mosaic_0001>
module attributes {stable_mosaic.version = 11 : i64} {
  func.func @_residual_linear_kernel_f32(%arg0: i32, %arg1: i32, %arg2: i32, %arg3: memref<8x128xf32, #tpu.memory_space<vmem>>, %arg4: memref<128x128xf32, #tpu.memory_space<vmem>>, %arg5: memref<1x128xf32, #tpu.memory_space<vmem>>, %arg6: memref<8x128xf32, #tpu.memory_space<vmem>>) attributes {dimension_semantics = [#tpu.dimension_semantics<parallel>, #tpu.dimension_semantics<parallel>, #tpu.dimension_semantics<arbitrary>], iteration_bounds = array<i64: 2, 1, 1>, scalar_prefetch = 0 : i64, scratch_operands = 0 : i64, tpu.core_type = #tpu.core_type<tc>, window_params = [{transform_indices = @transform_0, window_bounds = array<i64: 8, 128>}, {transform_indices = @transform_1, window_bounds = array<i64: 128, 128>}, {transform_indices = @transform_2, window_bounds = array<i64: 1, 128>}, {transform_indices = @transform_3, window_bounds = array<i64: 8, 128>}]} {
    %c0_i32 = arith.constant 0 : i32
    %0 = arith.cmpi eq, %arg2, %c0_i32 : i32
    %1 = arith.extui %0 : i1 to i32
    %c0_i32_0 = arith.constant 0 : i32
    %2 = arith.cmpi ne, %1, %c0_i32_0 : i32
    scf.if %2 {
      %c0_9 = arith.constant 0 : index
      %c0_10 = arith.constant 0 : index
      %12 = vector.load %arg5[%c0_9, %c0_10] : memref<1x128xf32, #tpu.memory_space<vmem>>, vector<1x128xf32>
      %13 = vector.shape_cast %12 : vector<1x128xf32> to vector<1x128xf32>
      %14 = vector.broadcast %13 : vector<1x128xf32> to vector<8x128xf32>
      %c0_11 = arith.constant 0 : index
      %c0_12 = arith.constant 0 : index
      %15 = vector.load %arg6[%c0_11, %c0_12] : memref<8x128xf32, #tpu.memory_space<vmem>>, vector<8x128xf32>
      tpu.vector_store %arg6[%c0_11, %c0_12], %14 {strides = array<i32>} : memref<8x128xf32, #tpu.memory_space<vmem>>, vector<8x128xf32>,
    } else {
    }
    %3 = arith.cmpi eq, %arg2, %arg1 : i32
    %4 = arith.extui %3 : i1 to i32
    %c0_i32_1 = arith.constant 0 : i32
    %5 = arith.cmpi ne, %4, %c0_i32_1 : i32
    scf.if %5 {
      %c0_9 = arith.constant 0 : index
      %c0_10 = arith.constant 0 : index
      %12 = vector.load %arg6[%c0_9, %c0_10] : memref<8x128xf32, #tpu.memory_space<vmem>>, vector<8x128xf32>
      %c0_11 = arith.constant 0 : index
      %c0_12 = arith.constant 0 : index
      %13 = vector.load %arg3[%c0_11, %c0_12] : memref<8x128xf32, #tpu.memory_space<vmem>>, vector<8x128xf32>
      %14 = arith.addf %12, %13 : vector<8x128xf32>
      %c0_13 = arith.constant 0 : index
      %c0_14 = arith.constant 0 : index
      %15 = vector.load %arg6[%c0_13, %c0_14] : memref<8x128xf32, #tpu.memory_space<vmem>>, vector<8x128xf32>
      tpu.vector_store %arg6[%c0_13, %c0_14], %14 {strides = array<i32>} : memref<8x128xf32, #tpu.memory_space<vmem>>, vector<8x128xf32>,
    } else {
    }
    %c0 = arith.constant 0 : index
    %c0_2 = arith.constant 0 : index
    %6 = vector.load %arg6[%c0, %c0_2] : memref<8x128xf32, #tpu.memory_space<vmem>>, vector<8x128xf32>
    %c0_3 = arith.constant 0 : index
    %c0_4 = arith.constant 0 : index
    %7 = vector.load %arg3[%c0_3, %c0_4] : memref<8x128xf32, #tpu.memory_space<vmem>>, vector<8x128xf32>
    %c0_5 = arith.constant 0 : index
    %c0_6 = arith.constant 0 : index
    %8 = vector.load %arg4[%c0_5, %c0_6] : memref<128x128xf32, #tpu.memory_space<vmem>>, vector<128x128xf32>
    %cst = arith.constant dense<0.000000e+00> : vector<8x128xf32>
    %9 = tpu.matmul %7, %8, %cst {dimension_numbers = #tpu.dot_dimension_numbers<[1], [0], [0], [1], [0, 0, 1, 1], [], []>} : vector<8x128xf32>, vector<128x128xf32>, vector<8x128xf32> -> vector<8x128xf32>
    %10 = arith.addf %6, %9 : vector<8x128xf32>
    %c0_7 = arith.constant 0 : index
    %c0_8 = arith.constant 0 : index
    %11 = vector.load %arg6[%c0_7, %c0_8] : memref<8x128xf32, #tpu.memory_space<vmem>>, vector<8x128xf32>
    tpu.vector_store %arg6[%c0_7, %c0_8], %10 {strides = array<i32>} : memref<8x128xf32, #tpu.memory_space<vmem>>, vector<8x128xf32>,
    return
  }
  func.func @transform_0(%arg0: i32, %arg1: i32, %arg2: i32) -> (i32, i32) {
    %c0_i32 = arith.constant 0 : i32
    return %arg0, %arg2 : i32, i32
  }
  func.func @transform_1(%arg0: i32, %arg1: i32, %arg2: i32) -> (i32, i32) {
    %c0_i32 = arith.constant 0 : i32
    return %arg2, %arg1 : i32, i32
  }
  func.func @transform_2(%arg0: i32, %arg1: i32, %arg2: i32) -> (i32, i32) {
    %c0_i32 = arith.constant 0 : i32
    %c0_i32_0 = arith.constant 0 : i32
    return %c0_i32, %arg1 : i32, i32
  }
  func.func @transform_3(%arg0: i32, %arg1: i32, %arg2: i32) -> (i32, i32) {
    %c0_i32 = arith.constant 0 : i32
    return %arg0, %arg1 : i32, i32
  }
}

</mosaic_0001>

<llo_original>
// kernel: residual_linear.1
$region0: #{residual_linear.1}
  #allocation0 [shape = 'u32[]', space=smem, size = 0x4, offset = 0x4, fixed_abs, tag = 'smem constant byte address 0x4 - core index']
  #allocation1 [shape = 'u32[72,128]{1,0:T(1,128)}', space=vmem, size = 0x9000, scoped, tag = 'internal scratch']
  %s0 = inlined_call_operand.vmem [shape: f32[16,128], index: 0, kind: input, shape index: {}]
  %s1 = inlined_call_operand.vmem [shape: f32[128,128], index: 1, kind: input, shape index: {}]
  %s2 = inlined_call_operand.vmem [shape: f32[1,128], index: 2, kind: input, shape index: {}]
  %s3 = inlined_call_operand.vmem [shape: f32[16,128], index: 3, kind: output, shape index: {}]
  %s4 = sld [smem:[#allocation0]]
  $region53: #{residual_linear.1} parent=0
    _
  %s6 = ssub.s32 1, %s4
  %s7 = scalar_select 0, %s6, %s4
  loop: start=0, step=1, limit=4
  $region2: #{residual_linear.1} parent=0 // loop_pre_header
    _
  $region3: #{residual_linear.1} parent=0 // loop_header
    %s9 = sphi 0, %s13
    %p10 = scmp.ge.s32.totalorder %s9, 4
    %s16 = sphi 0, %s35
    %s17 = sphi 0, %s31
    %s18 = sphi 0, %s27
    %s19 = sphi 0, %s16
    %s20 = sphi 0, %s17
    %s21 = sphi 0, %s18
    %s22 = sphi 0, %s19
    %s23 = sphi 0, %s20
    %s24 = sphi 0, %s21
    %s40 = sphi 0, %s42
    %s43 = sphi 0, %s40
    %s44 = sphi 0, %s43
    %s60 = sphi 0, %s44
    %s68 = sphi 0, %s70
    %s71 = sphi 0, %s68
    %s72 = sphi 0, %s71
    %s88 = sphi 0, %s72
    %s94 = sphi 0, %s96
    %s97 = sphi 0, %s94
    %s98 = sphi 0, %s97
    %s114 = sphi 0, %s98
    %s122 = sphi 0, %s124
    %s125 = sphi 0, %s122
    %s126 = sphi 0, %s125
    %s142 = sphi 0, %s126
  $region4: #{residual_linear.1} parent=0 // loop_header_branch
    %12 = sbr.rel (%p10) target = $region8
  $region5: #{residual_linear.1} parent=0 // loop_body
    %s14 = ssub.s32 %s9, 1
    %s15 = ssub.s32 %s9, 2
    %s25 = sadd.s32 1, %s18
    %p26 = scmp.ge.s32.totalorder %s25, 1
    %s27 = scalar_select %p26, 0, %s25
    %s28 = sadd.s32 1, %s17
    %s29 = scalar_select %p26, %s28, %s17
    %p30 = scmp.ge.s32.totalorder %s29, 1
    %s31 = scalar_select %p30, 0, %s29
    %s32 = sadd.s32 1, %s16
    %s33 = scalar_select %p30, %s32, %s16
    %p34 = scmp.ge.s32.totalorder %s33, 2
    %s35 = scalar_select %p34, 0, %s33
    %s36 = ssub.s32 %s16, %s35
    %s37 = ssub.s32 %s18, %s27
    %s38 = sor.u32 %s36, %s37
    %p39 = scmp.eq.s32.totalorder %s38, 0
    %s41 = sadd.s32 %s40, 1
    %s42 = scalar_select %p39, %s40, %s41
    %p45 = pneg %p39
    %p46 = scmp.eq.s32.totalorder %s9, 1
    %p47 = por %p45, %p46
    %p48 = scmp.ne.s32.totalorder %s40, %s43
    %p49 = scmp.eq.s32.totalorder %s9, 0
    %p50 = por %p48, %p49
    %p51 = scmp.ne.s32.totalorder %s40, %s43
    %p52 = scmp.eq.s32.totalorder %s14, 1
    %p53 = por %p51, %p52
    %p54 = scmp.ne.s32.totalorder %s43, %s44
    %p55 = scmp.eq.s32.totalorder %s14, 0
    %p56 = por %p54, %p55
    %p57 = scmp.ne.s32.totalorder %s43, %s44
    %p58 = scmp.eq.s32.totalorder %s15, 1
    %p59 = por %p57, %p58
    %p61 = scmp.ne.s32.totalorder %s44, %s60
    %p62 = scmp.eq.s32.totalorder %s15, 0
    %p63 = por %p61, %p62
    %s64 = ssub.s32 %s18, %s27
    %s65 = ssub.s32 %s17, %s31
    %s66 = sor.u32 %s64, %s65
    %p67 = scmp.eq.s32.totalorder %s66, 0
    %s69 = sadd.s32 %s68, 1
    %s70 = scalar_select %p67, %s68, %s69
    %p73 = pneg %p67
    %p74 = scmp.eq.s32.totalorder %s9, 1
    %p75 = por %p73, %p74
    %p76 = scmp.ne.s32.totalorder %s68, %s71
    %p77 = scmp.eq.s32.totalorder %s9, 0
    %p78 = por %p76, %p77
    %p79 = scmp.ne.s32.totalorder %s68, %s71
    %p80 = scmp.eq.s32.totalorder %s14, 1
    %p81 = por %p79, %p80
    %p82 = scmp.ne.s32.totalorder %s71, %s72
    %p83 = scmp.eq.s32.totalorder %s14, 0
    %p84 = por %p82, %p83
    %p85 = scmp.ne.s32.totalorder %s71, %s72
    %p86 = scmp.eq.s32.totalorder %s15, 1
    %p87 = por %p85, %p86
    %p89 = scmp.ne.s32.totalorder %s72, %s88
    %p90 = scmp.eq.s32.totalorder %s15, 0
    %p91 = por %p89, %p90
    %s92 = ssub.s32 %s17, %s31
    %p93 = scmp.eq.s32.totalorder %s92, 0
    %s95 = sadd.s32 %s94, 1
    %s96 = scalar_select %p93, %s94, %s95
    %p99 = pneg %p93
    %p100 = scmp.eq.s32.totalorder %s9, 1
    %p101 = por %p99, %p100
    %p102 = scmp.ne.s32.totalorder %s94, %s97
    %p103 = scmp.eq.s32.totalorder %s9, 0
    %p104 = por %p102, %p103
    %p105 = scmp.ne.s32.totalorder %s94, %s97
    %p106 = scmp.eq.s32.totalorder %s14, 1
    %p107 = por %p105, %p106
    %p108 = scmp.ne.s32.totalorder %s97, %s98
    %p109 = scmp.eq.s32.totalorder %s14, 0
    %p110 = por %p108, %p109
    %p111 = scmp.ne.s32.totalorder %s97, %s98
    %p112 = scmp.eq.s32.totalorder %s15, 1
    %p113 = por %p111, %p112
    %p115 = scmp.ne.s32.totalorder %s98, %s114
    %p116 = scmp.eq.s32.totalorder %s15, 0
    %p117 = por %p115, %p116
    %s118 = ssub.s32 %s16, %s35
    %s119 = ssub.s32 %s17, %s31
    %s120 = sor.u32 %s118, %s119
    %p121 = scmp.eq.s32.totalorder %s120, 0
    %s123 = sadd.s32 %s122, 1
    %s124 = scalar_select %p121, %s122, %s123
    %p127 = pneg %p121
    %p128 = scmp.eq.s32.totalorder %s9, 1
    %p129 = por %p127, %p128
    %p130 = scmp.ne.s32.totalorder %s122, %s125
    %p131 = scmp.eq.s32.totalorder %s9, 0
    %p132 = por %p130, %p131
    %p133 = scmp.ne.s32.totalorder %s122, %s125
    %p134 = scmp.eq.s32.totalorder %s14, 1
    %p135 = por %p133, %p134
    %p136 = scmp.ne.s32.totalorder %s125, %s126
    %p137 = scmp.eq.s32.totalorder %s14, 0
    %p138 = por %p136, %p137
    %p139 = scmp.ne.s32.totalorder %s125, %s126
    %p140 = scmp.eq.s32.totalorder %s15, 1
    %p141 = por %p139, %p140
    %p143 = scmp.ne.s32.totalorder %s126, %s142
    %p144 = scmp.eq.s32.totalorder %s15, 0
    %p145 = por %p143, %p144
    %p146 = scmp.le.s32.totalorder 1, %s9
    %p147 = scmp.lt.s32.totalorder %s9, 3
    %p148 = pnand %p146, %p147
    %p149 = pneg %p148
    // Predicated region
    $region9: #{residual_linear.1} parent=5 // pred_check
      _
    $region10: #{residual_linear.1} parent=5 // pred_check_branch
      %151 = sbr.rel (%p148) target = $region12
    $region11: #{residual_linear.1} parent=5 // pred_region
      %s152 = ssub.s32 %s9, 1
      // Predicated region
      $region13: #{residual_linear.1} parent=11 // pred_check
        %p153 = pneg %p84
      $region14: #{residual_linear.1} parent=11 // pred_check_branch
        %155 = sbr.rel (%p153) target = $region16
      $region15: #{residual_linear.1} parent=11 // pred_region
        %s156 = smul.u32 16, %s21
        %p157 = scmp.lt.s32.totalorder %s156, 15
        %s158 = scalar_select %p157, %s156, 15
        %p159 = scmp.lt.s32.totalorder %s20, 0
        %s160 = scalar_select %p159, %s20, 0
        %s161 = sadd.s32 %s160, %s158
        %s162 = smul.addr %s161, 8
        %s163 = scalar_lea.vmem %s1, %s162
        %s164 = smul.u32 16, %s21
      $region16: #{residual_linear.1} parent=11 // pred_fallthru
        _
      // Predicated region
      $region17: #{residual_linear.1} parent=11 // pred_check
        %p165 = pneg %p110
      $region18: #{residual_linear.1} parent=11 // pred_check_branch
        %167 = sbr.rel (%p165) target = $region20
      $region19: #{residual_linear.1} parent=11 // pred_region
        %p168 = scmp.lt.s32.totalorder %s20, 0
        %s169 = scalar_select %p168, %s20, 0
        %s170 = scalar_lea.vmem %s2, %s169
      $region20: #{residual_linear.1} parent=11 // pred_fallthru
        _
    $region12: #{residual_linear.1} parent=5 // pred_fallthru
      _
    %p171 = scmp.lt.s32.totalorder %s9, 2
    // Predicated region
    $region21: #{residual_linear.1} parent=5 // pred_check
      %p172 = pneg %p171
    $region22: #{residual_linear.1} parent=5 // pred_check_branch
      %174 = sbr.rel (%p172) target = $region24
    $region23: #{residual_linear.1} parent=5 // pred_region
      // Predicated region
      $region25: #{residual_linear.1} parent=23 // pred_check
        %p175 = pneg %p50
      $region26: #{residual_linear.1} parent=23 // pred_check_branch
        %177 = sbr.rel (%p175) target = $region28
      $region27: #{residual_linear.1} parent=23 // pred_region
        %p178 = scmp.lt.s32.totalorder %s16, 1
        %s179 = scalar_select %p178, %s16, 1
        %p180 = scmp.lt.s32.totalorder %s18, 0
        %s181 = scalar_select %p180, %s18, 0
        %s182 = sadd.s32 %s181, %s179
        %s183 = smul.addr %s182, 8
        %s184 = scalar_lea.vmem %s0, %s183
      $region28: #{residual_linear.1} parent=23 // pred_fallthru
        _
    $region24: #{residual_linear.1} parent=5 // pred_fallthru
      _
    %p185 = scmp.le.s32.totalorder 1, %s9
    %p186 = scmp.lt.s32.totalorder %s9, 3
    %p187 = pnand %p185, %p186
    %p188 = pneg %p187
    // Predicated region
    $region29: #{residual_linear.1} parent=5 // pred_check
      _
    $region30: #{residual_linear.1} parent=5 // pred_check_branch
      %190 = sbr.rel (%p187) target = $region32
    $region31: #{residual_linear.1} parent=5 // pred_region
      %s191 = ssub.s32 %s9, 1
      %p192 = scmp.lt.s32.totalorder %s19, 1
      %s193 = scalar_select %p192, %s19, 1
      %p194 = scmp.lt.s32.totalorder %s21, 0
      %s195 = scalar_select %p194, %s21, 0
      %s196 = sadd.s32 %s195, %s193
      %s197 = smul.addr %s196, 8
      %s198 = scalar_lea.vmem %s0, %s197
      %p199 = pneg %p56
      %p200 = pneg %p53
      %s201 = smul.u32 16, %s21
      %p202 = scmp.lt.s32.totalorder %s201, 15
      %s203 = scalar_select %p202, %s201, 15
      %p204 = scmp.lt.s32.totalorder %s20, 0
      %s205 = scalar_select %p204, %s20, 0
      %s206 = sadd.s32 %s205, %s203
      %s207 = smul.addr %s206, 8
      %s208 = scalar_lea.vmem %s1, %s207
      %p209 = pneg %p84
      %p210 = pneg %p81
      %p211 = scmp.lt.s32.totalorder %s20, 0
      %s212 = scalar_select %p211, %s20, 0
      %s213 = scalar_lea.vmem %s2, %s212
      %p214 = pneg %p110
      %p215 = pneg %p107
      %p216 = pneg %p138
      %p217 = pneg %p135
      %p218 = scmp.lt.s32.totalorder %s19, 1
      %s219 = scalar_select %p218, %s19, 1
      %p220 = scmp.lt.s32.totalorder %s20, 0
      %s221 = scalar_select %p220, %s20, 0
      %s222 = sadd.s32 %s221, %s219
      %s223 = smul.addr %s222, 8
      %s224 = scalar_lea.vmem %s3, %s223
      %p225 = scmp.lt.s32.totalorder %s19, 1
      %s226 = scalar_select %p225, %s19, 1
      %p227 = scmp.lt.s32.totalorder %s21, 0
      %s228 = scalar_select %p227, %s21, 0
      %s229 = sadd.s32 %s228, %s226
      %s230 = smul.addr %s229, 8
      %s231 = scalar_lea.vmem %s0, %s230
      %s232 = smul.u32 16, %s21
      %p233 = scmp.lt.s32.totalorder %s232, 15
      %s234 = scalar_select %p233, %s232, 15
      %p235 = scmp.lt.s32.totalorder %s20, 0
      %s236 = scalar_select %p235, %s20, 0
      %s237 = sadd.s32 %s236, %s234
      %s238 = smul.addr %s237, 8
      %s239 = scalar_lea.vmem %s1, %s238
      %s240 = smul.u32 16, %s21
      %p241 = scmp.lt.s32.totalorder %s20, 0
      %s242 = scalar_select %p241, %s20, 0
      %s243 = scalar_lea.vmem %s2, %s242
      %p244 = scmp.lt.s32.totalorder %s19, 1
      %s245 = scalar_select %p244, %s19, 1
      %p246 = scmp.lt.s32.totalorder %s20, 0
      %s247 = scalar_select %p246, %s20, 0
      %s248 = sadd.s32 %s247, %s245
      %s249 = smul.addr %s248, 8
      %s250 = scalar_lea.vmem %s3, %s249
      %p251 = scmp.eq.s32.totalorder %s21, 0
      // Predicated region
      $region33: #{residual_linear.1} parent=31 // pred_check
        %p252 = pneg %p251
      $region34: #{residual_linear.1} parent=31 // pred_check_branch
        %254 = sbr.rel (%p252) target = $region36
      $region35: #{residual_linear.1} parent=31 // pred_region
        %v255 = vld [vmem:[%s243] sm:$0x1]
        %v257 = vperm.slane %v255, 0
        %259 = vst [vmem:[%s250] sm:$0xff] %v257
      $region36: #{residual_linear.1} parent=31 // pred_fallthru
        _
      %p260 = scmp.eq.s32.totalorder %s21, %s20
      // Predicated region
      $region37: #{residual_linear.1} parent=31 // pred_check
        %p261 = pneg %p260
      $region38: #{residual_linear.1} parent=31 // pred_check_branch
        %263 = sbr.rel (%p261) target = $region40
      $region39: #{residual_linear.1} parent=31 // pred_region
        %v264 = vld [vmem:[%s250] sm:$0xff]
        %v265 = vld [vmem:[%s231] sm:$0xff]
        %v266 = vadd.f32 %v264, %v265
        %267 = vst [vmem:[%s250] sm:$0xff] %v266
      $region40: #{residual_linear.1} parent=31 // pred_fallthru
        _
      %v268 = vld [vmem:[%s250] sm:$0xff]
      %v269 = vld [vmem:[%s231] sm:$0xff]
      %v270 = vld [vmem:[%s239] sm:$0xff]
      %v271 = vld [vmem:[%s239 + $0x8] sm:$0xff]
      %v272 = vld [vmem:[%s239 + $0x10] sm:$0xff]
      %v273 = vld [vmem:[%s239 + $0x18] sm:$0xff]
      %v274 = vld [vmem:[%s239 + $0x20] sm:$0xff]
      %v275 = vld [vmem:[%s239 + $0x28] sm:$0xff]
      %v276 = vld [vmem:[%s239 + $0x30] sm:$0xff]
      %v277 = vld [vmem:[%s239 + $0x38] sm:$0xff]
      %v278 = vld [vmem:[%s239 + $0x40] sm:$0xff]
      %v279 = vld [vmem:[%s239 + $0x48] sm:$0xff]
      %v280 = vld [vmem:[%s239 + $0x50] sm:$0xff]
      %v281 = vld [vmem:[%s239 + $0x58] sm:$0xff]
      %v282 = vld [vmem:[%s239 + $0x60] sm:$0xff]
      %v283 = vld [vmem:[%s239 + $0x68] sm:$0xff]
      %v284 = vld [vmem:[%s239 + $0x70] sm:$0xff]
      %v285 = vld [vmem:[%s239 + $0x78] sm:$0xff]
      %286 = vmatpush.msra.mxu0 %v285
      %287 = vmatpush.msra.mxu0 %v284
      %288 = vmatpush.msra.mxu0 %v283
      %289 = vmatpush.msra.mxu0 %v282
      %290 = vmatpush.msra.mxu0 %v281
      %291 = vmatpush.msra.mxu0 %v280
      %292 = vmatpush.msra.mxu0 %v279
      %293 = vmatpush.msra.mxu0 %v278
      %294 = vmatpush.msra.mxu0 %v277
      %295 = vmatpush.msra.mxu0 %v276
      %296 = vmatpush.msra.mxu0 %v275
      %297 = vmatpush.msra.mxu0 %v274
      %298 = vmatpush.msra.mxu0 %v273
      %299 = vmatpush.msra.mxu0 %v272
      %300 = vmatpush.msra.mxu0 %v271
      %301 = vmatpush.msra.mxu0 %v270
      %302 = vmatmul.f32.gmra.mxu0 %v269
      %v303 = vpop.f32.mrf.mxu0
      %v304 = vadd.f32 0.0, %v303
      %305 = vdwg.mxu0
      %v306 = vadd.f32 %v268, %v304
      %307 = vst [vmem:[%s250] sm:$0xff] %v306
      %p308 = scmp.lt.s32.totalorder %s19, 1
      %s309 = scalar_select %p308, %s19, 1
      %p310 = scmp.lt.s32.totalorder %s20, 0
      %s311 = scalar_select %p310, %s20, 0
      %s312 = sadd.s32 %s311, %s309
      %s313 = smul.addr %s312, 8
      %s314 = scalar_lea.vmem %s3, %s313
      // Predicated region
      $region41: #{residual_linear.1} parent=31 // pred_check
        %p315 = pneg %p135
      $region42: #{residual_linear.1} parent=31 // pred_check_branch
        %317 = sbr.rel (%p315) target = $region44
      $region43: #{residual_linear.1} parent=31 // pred_region
        _
      $region44: #{residual_linear.1} parent=31 // pred_fallthru
        _
    $region32: #{residual_linear.1} parent=5 // pred_fallthru
      _
    %p318 = scmp.le.s32.totalorder 2, %s9
    // Predicated region
    $region45: #{residual_linear.1} parent=5 // pred_check
      %p319 = pneg %p318
    $region46: #{residual_linear.1} parent=5 // pred_check_branch
      %321 = sbr.rel (%p319) target = $region48
    $region47: #{residual_linear.1} parent=5 // pred_region
      %s322 = ssub.s32 %s9, 2
      // Predicated region
      $region49: #{residual_linear.1} parent=47 // pred_check
        %p323 = pneg %p141
      $region50: #{residual_linear.1} parent=47 // pred_check_branch
        %325 = sbr.rel (%p323) target = $region52
      $region51: #{residual_linear.1} parent=47 // pred_region
        %p326 = scmp.lt.s32.totalorder %s22, 1
        %s327 = scalar_select %p326, %s22, 1
        %p328 = scmp.lt.s32.totalorder %s23, 0
        %s329 = scalar_select %p328, %s23, 0
        %s330 = sadd.s32 %s329, %s327
        %s331 = smul.addr %s330, 8
        %s332 = scalar_lea.vmem %s3, %s331
      $region52: #{residual_linear.1} parent=47 // pred_fallthru
        _
    $region48: #{residual_linear.1} parent=5 // pred_fallthru
      _
  $region6: #{residual_linear.1} parent=0 // loop_footer
    %s13 = sadd.s32 1, %s9
  $region7: #{residual_linear.1} parent=0 // loop_footer_branch
    %8 = sbr.rel target = $region3
  $region8: #{residual_linear.1} parent=0 // loop_exit
    _

</llo_original>
